<compile_context>
chip_gen: v5e
topology: v5e:2x2
jax: 0.10.0
libtpu: 0.0.40
codegen_flags: <defaults>
</compile_context>

<pallas_src>
import functools

import jax
import jax.numpy as jnp
from jax.experimental import pallas as pl
from jax.experimental.pallas import tpu as pltpu


def ppo_policy_kernel(x_ref, w1_ref, b1_ref, w2_ref, b2_ref, w3_ref, b3_ref,
                      mean_ref):
    """Fused 2-layer MLP (LeakyReLU) + policy head for one batch tile."""
    slope = jnp.float32(0.01)  # nn.LeakyReLU default negative_slope

    # common[0]: Linear(dim_state, dim_hidden) + LeakyReLU
    x = x_ref[...].astype(jnp.bfloat16)
    h = jnp.dot(x, w1_ref[...].astype(jnp.bfloat16),
                preferred_element_type=jnp.float32) + b1_ref[...]
    h = jnp.where(h > 0, h, slope * h)

    # common[2]: Linear(dim_hidden, dim_hidden) + LeakyReLU
    h = jnp.dot(h.astype(jnp.bfloat16), w2_ref[...].astype(jnp.bfloat16),
                preferred_element_type=jnp.float32) + b2_ref[...]
    h = jnp.where(h > 0, h, slope * h)

    # policy head: Linear(dim_hidden, dim_action)
    mean_ref[...] = jnp.dot(h.astype(jnp.bfloat16),
                            w3_ref[...].astype(jnp.bfloat16),
                            preferred_element_type=jnp.float32) + b3_ref[...]


@functools.partial(jax.jit, static_argnames=("tb",))
def ppo_policy_forward(x, params, tb=None):
    """Returns (mean, std) of the Normal distribution produced by forward()."""
    w1, b1, w2, b2, w3, b3, log_std = params
    B, dim_state = x.shape
    dim_hidden = w1.shape[1]
    dim_action = w3.shape[1]

    # Batch tile: 256 rows for large batches (fills v6e/v7x MXU rows and
    # amortizes per-step overhead); otherwise one tile rounded up to 8.
    if tb is None:
        tb = 256 if B >= 256 else max(8, ((B + 7) // 8) * 8)
    grid = pl.cdiv(B, tb)
    b_pad = grid * tb
    if b_pad != B:
        x = jnp.pad(x, ((0, b_pad - B), (0, 0)))

    x_spec = pl.BlockSpec((tb, dim_state), lambda i: (i, 0))
    resident = lambda a: pl.BlockSpec(a.shape, lambda i: (0, 0))  # stays in VMEM
    out_spec = pl.BlockSpec((tb, dim_action), lambda i: (i, 0))

    flops = 2 * b_pad * (dim_state * dim_hidden
                         + dim_hidden * dim_hidden
                         + dim_hidden * dim_action)
    bytes_accessed = 4 * (b_pad * dim_state
                          + dim_state * dim_hidden + dim_hidden
                          + dim_hidden * dim_hidden + dim_hidden
                          + dim_hidden * dim_action + dim_action
                          + b_pad * dim_action)

    mean = pl.pallas_call(
        ppo_policy_kernel,
        grid=(grid,),
        out_shape=jax.ShapeDtypeStruct((b_pad, dim_action), jnp.float32),
        in_specs=[x_spec, resident(w1), resident(b1), resident(w2),
                  resident(b2), resident(w3), resident(b3)],
        out_specs=out_spec,
        compiler_params=pltpu.CompilerParams(
            dimension_semantics=("parallel",),   # v7x: shard batch over 2 TCs
            vmem_limit_bytes=32 << 20,           # fits v7x's 64 MiB VMEM easily
        ),
        cost_estimate=pl.CostEstimate(
            flops=flops, transcendentals=0, bytes_accessed=bytes_accessed),
    )(x, w1, b1, w2, b2, w3, b3)

    mean = mean[:B]
    # std = exp(log_std).expand_as(mean): independent of x -> computed once.
    std = jnp.broadcast_to(jnp.exp(log_std), mean.shape)
    return mean, std


def xavier_normal(key, shape):
    fan_in, fan_out = shape  # weight stored as [in, out]
    std = (2.0 / (fan_in + fan_out)) ** 0.5
    return std * jax.random.normal(key, shape, dtype=jnp.float32)


def init_ppo_policy_params(key, dim_state, dim_hidden, dim_action,
                           log_std_init=0.0):
    k1, k2, k3 = jax.random.split(key, 3)
    w1 = xavier_normal(k1, (dim_state, dim_hidden))
    b1 = jnp.zeros((1, dim_hidden), jnp.float32)
    w2 = xavier_normal(k2, (dim_hidden, dim_hidden))
    b2 = jnp.zeros((1, dim_hidden), jnp.float32)
    w3 = xavier_normal(k3, (dim_hidden, dim_action))
    b3 = jnp.zeros((1, dim_action), jnp.float32)
    log_std = jnp.full((1, dim_action), log_std_init, jnp.float32)
    return (w1, b1, w2, b2, w3, b3, log_std)


def reference_forward(x, params):
    """Plain-JAX f32 reference of PPOPolicy.forward (non-SAC) -> (mean, std)."""
    w1, b1, w2, b2, w3, b3, log_std = params
    leaky = lambda h: jnp.where(h > 0, h, 0.01 * h)
    h = leaky(x @ w1 + b1)
    h = leaky(h @ w2 + b2)
    mean = h @ w3 + b3
    std = jnp.exp(jnp.broadcast_to(log_std, mean.shape))
    return mean, std


if __name__ == "__main__":
    # Small shapes consistent with the module defaults:
    # dim_state=16, dim_hidden=128, dim_action=8.  B=48 with tb=16 exercises a
    # multi-step batch grid while staying tiny.
    B, dim_state, dim_hidden, dim_action = 48, 16, 128, 8

    key = jax.random.PRNGKey(0)
    kx, kp = jax.random.split(key)
    x = jax.random.normal(kx, (B, dim_state), dtype=jnp.float32)
    params = init_ppo_policy_params(kp, dim_state, dim_hidden, dim_action)

    mean, std = ppo_policy_forward(x, params, tb=16)
    mean, std = jax.block_until_ready((mean, std))

    mean_ref, std_ref = reference_forward(x, params)
    # Matmuls run with bf16 MXU inputs (f32 accumulation) -> relaxed tolerance
    # vs. the pure-f32 reference.
    assert mean.shape == (B, dim_action) and std.shape == (B, dim_action)
    assert jnp.allclose(mean, mean_ref, atol=3e-2, rtol=3e-2), (
        float(jnp.max(jnp.abs(mean - mean_ref))))
    assert jnp.allclose(std, std_ref, atol=1e-6, rtol=1e-6)

    print("KERNEL_OK")
</pallas_src>

<mosaic_0001>
module attributes {stable_mosaic.version = 11 : i64} {
  func.func @ppo_policy_kernel(%arg0: i32, %arg1: memref<16x16xf32, #tpu.memory_space<vmem>>, %arg2: memref<16x128xf32, #tpu.memory_space<vmem>>, %arg3: memref<1x128xf32, #tpu.memory_space<vmem>>, %arg4: memref<128x128xf32, #tpu.memory_space<vmem>>, %arg5: memref<1x128xf32, #tpu.memory_space<vmem>>, %arg6: memref<128x8xf32, #tpu.memory_space<vmem>>, %arg7: memref<1x8xf32, #tpu.memory_space<vmem>>, %arg8: memref<16x8xf32, #tpu.memory_space<vmem>>) attributes {dimension_semantics = [#tpu.dimension_semantics<parallel>], iteration_bounds = array<i64: 3>, scalar_prefetch = 0 : i64, scratch_operands = 0 : i64, tpu.core_type = #tpu.core_type<tc>, window_params = [{transform_indices = @transform_0, window_bounds = array<i64: 16, 16>}, {pipeline_mode = #tpu.pipeline_mode<synchronous>, transform_indices = @transform_1, window_bounds = array<i64: 16, 128>}, {pipeline_mode = #tpu.pipeline_mode<synchronous>, transform_indices = @transform_2, window_bounds = array<i64: 1, 128>}, {pipeline_mode = #tpu.pipeline_mode<synchronous>, transform_indices = @transform_3, window_bounds = array<i64: 128, 128>}, {pipeline_mode = #tpu.pipeline_mode<synchronous>, transform_indices = @transform_4, window_bounds = array<i64: 1, 128>}, {pipeline_mode = #tpu.pipeline_mode<synchronous>, transform_indices = @transform_5, window_bounds = array<i64: 128, 8>}, {pipeline_mode = #tpu.pipeline_mode<synchronous>, transform_indices = @transform_6, window_bounds = array<i64: 1, 8>}, {transform_indices = @transform_7, window_bounds = array<i64: 16, 8>}]} {
    %c0 = arith.constant 0 : index
    %c0_0 = arith.constant 0 : index
    %0 = vector.load %arg1[%c0, %c0_0] : memref<16x16xf32, #tpu.memory_space<vmem>>, vector<16x16xf32>
    %1 = arith.truncf %0 : vector<16x16xf32> to vector<16x16xbf16>
    %c0_1 = arith.constant 0 : index
    %c0_2 = arith.constant 0 : index
    %2 = vector.load %arg2[%c0_1, %c0_2] : memref<16x128xf32, #tpu.memory_space<vmem>>, vector<16x128xf32>
    %3 = arith.truncf %2 : vector<16x128xf32> to vector<16x128xbf16>
    %cst = arith.constant dense<0.000000e+00> : vector<16x128xf32>
    %4 = tpu.matmul %1, %3, %cst {dimension_numbers = #tpu.dot_dimension_numbers<[1], [0], [0], [1], [0, 0, 1, 1], [], []>} : vector<16x16xbf16>, vector<16x128xbf16>, vector<16x128xf32> -> vector<16x128xf32>
    %c0_3 = arith.constant 0 : index
    %c0_4 = arith.constant 0 : index
    %5 = vector.load %arg3[%c0_3, %c0_4] : memref<1x128xf32, #tpu.memory_space<vmem>>, vector<1x128xf32>
    %6 = vector.broadcast %5 : vector<1x128xf32> to vector<16x128xf32>
    %7 = arith.addf %4, %6 : vector<16x128xf32>
    %cst_5 = arith.constant 0.000000e+00 : f32
    %8 = vector.broadcast %cst_5 : f32 to vector<16x128xf32>
    %9 = arith.cmpf ogt, %7, %8 : vector<16x128xf32>
    %cst_6 = arith.constant 0.00999999977 : f32
    %10 = vector.broadcast %cst_6 : f32 to vector<16x128xf32>
    %11 = arith.mulf %10, %7 : vector<16x128xf32>
    %12 = arith.select %9, %7, %11 : vector<16x128xi1>, vector<16x128xf32>
    %13 = arith.truncf %12 : vector<16x128xf32> to vector<16x128xbf16>
    %c0_7 = arith.constant 0 : index
    %c0_8 = arith.constant 0 : index
    %14 = vector.load %arg4[%c0_7, %c0_8] : memref<128x128xf32, #tpu.memory_space<vmem>>, vector<128x128xf32>
    %15 = arith.truncf %14 : vector<128x128xf32> to vector<128x128xbf16>
    %cst_9 = arith.constant dense<0.000000e+00> : vector<16x128xf32>
    %16 = tpu.matmul %13, %15, %cst_9 {dimension_numbers = #tpu.dot_dimension_numbers<[1], [0], [0], [1], [0, 0, 1, 1], [], []>} : vector<16x128xbf16>, vector<128x128xbf16>, vector<16x128xf32> -> vector<16x128xf32>
    %c0_10 = arith.constant 0 : index
    %c0_11 = arith.constant 0 : index
    %17 = vector.load %arg5[%c0_10, %c0_11] : memref<1x128xf32, #tpu.memory_space<vmem>>, vector<1x128xf32>
    %18 = vector.broadcast %17 : vector<1x128xf32> to vector<16x128xf32>
    %19 = arith.addf %16, %18 : vector<16x128xf32>
    %cst_12 = arith.constant 0.000000e+00 : f32
    %20 = vector.broadcast %cst_12 : f32 to vector<16x128xf32>
    %21 = arith.cmpf ogt, %19, %20 : vector<16x128xf32>
    %cst_13 = arith.constant 0.00999999977 : f32
    %22 = vector.broadcast %cst_13 : f32 to vector<16x128xf32>
    %23 = arith.mulf %22, %19 : vector<16x128xf32>
    %24 = arith.select %21, %19, %23 : vector<16x128xi1>, vector<16x128xf32>
    %25 = arith.truncf %24 : vector<16x128xf32> to vector<16x128xbf16>
    %c0_14 = arith.constant 0 : index
    %c0_15 = arith.constant 0 : index
    %26 = vector.load %arg6[%c0_14, %c0_15] : memref<128x8xf32, #tpu.memory_space<vmem>>, vector<128x8xf32>
    %27 = arith.truncf %26 : vector<128x8xf32> to vector<128x8xbf16>
    %cst_16 = arith.constant dense<0.000000e+00> : vector<16x8xf32>
    %28 = tpu.matmul %25, %27, %cst_16 {dimension_numbers = #tpu.dot_dimension_numbers<[1], [0], [0], [1], [0, 0, 1, 1], [], []>} : vector<16x128xbf16>, vector<128x8xbf16>, vector<16x8xf32> -> vector<16x8xf32>
    %c0_17 = arith.constant 0 : index
    %c0_18 = arith.constant 0 : index
    %29 = vector.load %arg7[%c0_17, %c0_18] : memref<1x8xf32, #tpu.memory_space<vmem>>, vector<1x8xf32>
    %30 = vector.broadcast %29 : vector<1x8xf32> to vector<16x8xf32>
    %31 = arith.addf %28, %30 : vector<16x8xf32>
    %c0_19 = arith.constant 0 : index
    %c0_20 = arith.constant 0 : index
    %32 = vector.load %arg8[%c0_19, %c0_20] : memref<16x8xf32, #tpu.memory_space<vmem>>, vector<16x8xf32>
    tpu.vector_store %arg8[%c0_19, %c0_20], %31 {strides = array<i32>} : memref<16x8xf32, #tpu.memory_space<vmem>>, vector<16x8xf32>,
    return
  }
  func.func @transform_0(%arg0: i32) -> (i32, i32) {
    %c0_i32 = arith.constant 0 : i32
    %c0_i32_0 = arith.constant 0 : i32
    return %arg0, %c0_i32 : i32, i32
  }
  func.func @transform_1(%arg0: i32) -> (i32, i32) {
    %c0_i32 = arith.constant 0 : i32
    %c0_i32_0 = arith.constant 0 : i32
    %c0_i32_1 = arith.constant 0 : i32
    return %c0_i32, %c0_i32_0 : i32, i32
  }
  func.func @transform_2(%arg0: i32) -> (i32, i32) {
    %c0_i32 = arith.constant 0 : i32
    %c0_i32_0 = arith.constant 0 : i32
    %c0_i32_1 = arith.constant 0 : i32
    return %c0_i32, %c0_i32_0 : i32, i32
  }
  func.func @transform_3(%arg0: i32) -> (i32, i32) {
    %c0_i32 = arith.constant 0 : i32
    %c0_i32_0 = arith.constant 0 : i32
    %c0_i32_1 = arith.constant 0 : i32
    return %c0_i32, %c0_i32_0 : i32, i32
  }
  func.func @transform_4(%arg0: i32) -> (i32, i32) {
    %c0_i32 = arith.constant 0 : i32
    %c0_i32_0 = arith.constant 0 : i32
    %c0_i32_1 = arith.constant 0 : i32
    return %c0_i32, %c0_i32_0 : i32, i32
  }
  func.func @transform_5(%arg0: i32) -> (i32, i32) {
    %c0_i32 = arith.constant 0 : i32
    %c0_i32_0 = arith.constant 0 : i32
    %c0_i32_1 = arith.constant 0 : i32
    return %c0_i32, %c0_i32_0 : i32, i32
  }
  func.func @transform_6(%arg0: i32) -> (i32, i32) {
    %c0_i32 = arith.constant 0 : i32
    %c0_i32_0 = arith.constant 0 : i32
    %c0_i32_1 = arith.constant 0 : i32
    return %c0_i32, %c0_i32_0 : i32, i32
  }
  func.func @transform_7(%arg0: i32) -> (i32, i32) {
    %c0_i32 = arith.constant 0 : i32
    %c0_i32_0 = arith.constant 0 : i32
    return %arg0, %c0_i32 : i32, i32
  }
}

</mosaic_0001>

<llo_original>
// kernel: ppo_policy_forward.1
$region0: #{ppo_policy_forward.1}
  #allocation0 [shape = 'u32[]', space=smem, size = 0x4, offset = 0x4, fixed_abs, tag = 'smem constant byte address 0x4 - core index']
  #allocation1 [shape = 'u32[72,128]{1,0:T(1,128)}', space=vmem, size = 0x9000, scoped, tag = 'internal scratch']
  %s0 = inlined_call_operand.vmem [shape: f32[48,16], index: 0, kind: input, shape index: {}]
  %s1 = inlined_call_operand.vmem [shape: f32[16,128], index: 1, kind: input, shape index: {}]
  %s2 = inlined_call_operand.vmem [shape: f32[1,128], index: 2, kind: input, shape index: {}]
  %s3 = inlined_call_operand.vmem [shape: f32[128,128], index: 3, kind: input, shape index: {}]
  %s4 = inlined_call_operand.vmem [shape: f32[1,128], index: 4, kind: input, shape index: {}]
  %s5 = inlined_call_operand.vmem [shape: f32[128,8], index: 5, kind: input, shape index: {}]
  %s6 = inlined_call_operand.vmem [shape: f32[1,8], index: 6, kind: input, shape index: {}]
  %s7 = inlined_call_operand.vmem [shape: f32[48,8], index: 7, kind: output, shape index: {}]
  %s8 = sld [smem:[#allocation0]]
  $region61: #{ppo_policy_forward.1} parent=0
    _
  %s10 = ssub.s32 1, %s8
  %s11 = scalar_select 0, %s10, %s8
  loop: start=0, step=1, limit=5
  $region2: #{ppo_policy_forward.1} parent=0 // loop_pre_header
    _
  $region3: #{ppo_policy_forward.1} parent=0 // loop_header
    %s13 = sphi 0, %s17
    %p14 = scmp.ge.s32.totalorder %s13, 5
    %s23 = sphi 0, %s25
    %s26 = sphi 0, %s23
    %s27 = sphi 0, %s26
    %s43 = sphi 0, %s27
    %s47 = sphi 0, %s47
    %s49 = sphi 0, %s47
    %s50 = sphi 0, %s49
    %s64 = sphi 0, %s50
    %s68 = sphi 0, %s68
    %s70 = sphi 0, %s68
    %s71 = sphi 0, %s70
    %s85 = sphi 0, %s71
    %s89 = sphi 0, %s89
    %s91 = sphi 0, %s89
    %s92 = sphi 0, %s91
    %s106 = sphi 0, %s92
    %s110 = sphi 0, %s110
    %s112 = sphi 0, %s110
    %s113 = sphi 0, %s112
    %s127 = sphi 0, %s113
    %s131 = sphi 0, %s131
    %s133 = sphi 0, %s131
    %s134 = sphi 0, %s133
    %s148 = sphi 0, %s134
    %s152 = sphi 0, %s152
    %s154 = sphi 0, %s152
    %s155 = sphi 0, %s154
    %s169 = sphi 0, %s155
    %s175 = sphi 0, %s177
    %s178 = sphi 0, %s175
    %s179 = sphi 0, %s178
    %s195 = sphi 0, %s179
  $region4: #{ppo_policy_forward.1} parent=0 // loop_header_branch
    %16 = sbr.rel (%p14) target = $region8
  $region5: #{ppo_policy_forward.1} parent=0 // loop_body
    %s18 = ssub.s32 %s13, 1
    %s19 = ssub.s32 %s13, 2
    %s20 = sadd.s32 %s13, 1
    %s21 = ssub.s32 %s13, %s20
    %p22 = scmp.eq.s32.totalorder %s21, 0
    %s24 = sadd.s32 %s23, 1
    %s25 = scalar_select %p22, %s23, %s24
    %p28 = pneg %p22
    %p29 = scmp.eq.s32.totalorder %s13, 2
    %p30 = por %p28, %p29
    %p31 = scmp.ne.s32.totalorder %s23, %s26
    %p32 = scmp.eq.s32.totalorder %s13, 0
    %p33 = por %p31, %p32
    %p34 = scmp.ne.s32.totalorder %s23, %s26
    %p35 = scmp.eq.s32.totalorder %s18, 2
    %p36 = por %p34, %p35
    %p37 = scmp.ne.s32.totalorder %s26, %s27
    %p38 = scmp.eq.s32.totalorder %s18, 0
    %p39 = por %p37, %p38
    %p40 = scmp.ne.s32.totalorder %s26, %s27
    %p41 = scmp.eq.s32.totalorder %s19, 2
    %p42 = por %p40, %p41
    %p44 = scmp.ne.s32.totalorder %s27, %s43
    %p45 = scmp.eq.s32.totalorder %s19, 0
    %p46 = por %p44, %p45
    %s48 = sadd.s32 %s47, 1
    %p51 = scmp.eq.s32.totalorder %s13, 2
    %p52 = scmp.ne.s32.totalorder %s47, %s49
    %p53 = scmp.eq.s32.totalorder %s13, 0
    %p54 = por %p52, %p53
    %p55 = scmp.ne.s32.totalorder %s47, %s49
    %p56 = scmp.eq.s32.totalorder %s18, 2
    %p57 = por %p55, %p56
    %p58 = scmp.ne.s32.totalorder %s49, %s50
    %p59 = scmp.eq.s32.totalorder %s18, 0
    %p60 = por %p58, %p59
    %p61 = scmp.ne.s32.totalorder %s49, %s50
    %p62 = scmp.eq.s32.totalorder %s19, 2
    %p63 = por %p61, %p62
    %p65 = scmp.ne.s32.totalorder %s50, %s64
    %p66 = scmp.eq.s32.totalorder %s19, 0
    %p67 = por %p65, %p66
    %s69 = sadd.s32 %s68, 1
    %p72 = scmp.eq.s32.totalorder %s13, 2
    %p73 = scmp.ne.s32.totalorder %s68, %s70
    %p74 = scmp.eq.s32.totalorder %s13, 0
    %p75 = por %p73, %p74
    %p76 = scmp.ne.s32.totalorder %s68, %s70
    %p77 = scmp.eq.s32.totalorder %s18, 2
    %p78 = por %p76, %p77
    %p79 = scmp.ne.s32.totalorder %s70, %s71
    %p80 = scmp.eq.s32.totalorder %s18, 0
    %p81 = por %p79, %p80
    %p82 = scmp.ne.s32.totalorder %s70, %s71
    %p83 = scmp.eq.s32.totalorder %s19, 2
    %p84 = por %p82, %p83
    %p86 = scmp.ne.s32.totalorder %s71, %s85
    %p87 = scmp.eq.s32.totalorder %s19, 0
    %p88 = por %p86, %p87
    %s90 = sadd.s32 %s89, 1
    %p93 = scmp.eq.s32.totalorder %s13, 2
    %p94 = scmp.ne.s32.totalorder %s89, %s91
    %p95 = scmp.eq.s32.totalorder %s13, 0
    %p96 = por %p94, %p95
    %p97 = scmp.ne.s32.totalorder %s89, %s91
    %p98 = scmp.eq.s32.totalorder %s18, 2
    %p99 = por %p97, %p98
    %p100 = scmp.ne.s32.totalorder %s91, %s92
    %p101 = scmp.eq.s32.totalorder %s18, 0
    %p102 = por %p100, %p101
    %p103 = scmp.ne.s32.totalorder %s91, %s92
    %p104 = scmp.eq.s32.totalorder %s19, 2
    %p105 = por %p103, %p104
    %p107 = scmp.ne.s32.totalorder %s92, %s106
    %p108 = scmp.eq.s32.totalorder %s19, 0
    %p109 = por %p107, %p108
    %s111 = sadd.s32 %s110, 1
    %p114 = scmp.eq.s32.totalorder %s13, 2
    %p115 = scmp.ne.s32.totalorder %s110, %s112
    %p116 = scmp.eq.s32.totalorder %s13, 0
    %p117 = por %p115, %p116
    %p118 = scmp.ne.s32.totalorder %s110, %s112
    %p119 = scmp.eq.s32.totalorder %s18, 2
    %p120 = por %p118, %p119
    %p121 = scmp.ne.s32.totalorder %s112, %s113
    %p122 = scmp.eq.s32.totalorder %s18, 0
    %p123 = por %p121, %p122
    %p124 = scmp.ne.s32.totalorder %s112, %s113
    %p125 = scmp.eq.s32.totalorder %s19, 2
    %p126 = por %p124, %p125
    %p128 = scmp.ne.s32.totalorder %s113, %s127
    %p129 = scmp.eq.s32.totalorder %s19, 0
    %p130 = por %p128, %p129
    %s132 = sadd.s32 %s131, 1
    %p135 = scmp.eq.s32.totalorder %s13, 2
    %p136 = scmp.ne.s32.totalorder %s131, %s133
    %p137 = scmp.eq.s32.totalorder %s13, 0
    %p138 = por %p136, %p137
    %p139 = scmp.ne.s32.totalorder %s131, %s133
    %p140 = scmp.eq.s32.totalorder %s18, 2
    %p141 = por %p139, %p140
    %p142 = scmp.ne.s32.totalorder %s133, %s134
    %p143 = scmp.eq.s32.totalorder %s18, 0
    %p144 = por %p142, %p143
    %p145 = scmp.ne.s32.totalorder %s133, %s134
    %p146 = scmp.eq.s32.totalorder %s19, 2
    %p147 = por %p145, %p146
    %p149 = scmp.ne.s32.totalorder %s134, %s148
    %p150 = scmp.eq.s32.totalorder %s19, 0
    %p151 = por %p149, %p150
    %s153 = sadd.s32 %s152, 1
    %p156 = scmp.eq.s32.totalorder %s13, 2
    %p157 = scmp.ne.s32.totalorder %s152, %s154
    %p158 = scmp.eq.s32.totalorder %s13, 0
    %p159 = por %p157, %p158
    %p160 = scmp.ne.s32.totalorder %s152, %s154
    %p161 = scmp.eq.s32.totalorder %s18, 2
    %p162 = por %p160, %p161
    %p163 = scmp.ne.s32.totalorder %s154, %s155
    %p164 = scmp.eq.s32.totalorder %s18, 0
    %p165 = por %p163, %p164
    %p166 = scmp.ne.s32.totalorder %s154, %s155
    %p167 = scmp.eq.s32.totalorder %s19, 2
    %p168 = por %p166, %p167
    %p170 = scmp.ne.s32.totalorder %s155, %s169
    %p171 = scmp.eq.s32.totalorder %s19, 0
    %p172 = por %p170, %p171
    %s173 = ssub.s32 %s13, %s20
    %p174 = scmp.eq.s32.totalorder %s173, 0
    %s176 = sadd.s32 %s175, 1
    %s177 = scalar_select %p174, %s175, %s176
    %p180 = pneg %p174
    %p181 = scmp.eq.s32.totalorder %s13, 2
    %p182 = por %p180, %p181
    %p183 = scmp.ne.s32.totalorder %s175, %s178
    %p184 = scmp.eq.s32.totalorder %s13, 0
    %p185 = por %p183, %p184
    %p186 = scmp.ne.s32.totalorder %s175, %s178
    %p187 = scmp.eq.s32.totalorder %s18, 2
    %p188 = por %p186, %p187
    %p189 = scmp.ne.s32.totalorder %s178, %s179
    %p190 = scmp.eq.s32.totalorder %s18, 0
    %p191 = por %p189, %p190
    %p192 = scmp.ne.s32.totalorder %s178, %s179
    %p193 = scmp.eq.s32.totalorder %s19, 2
    %p194 = por %p192, %p193
    %p196 = scmp.ne.s32.totalorder %s179, %s195
    %p197 = scmp.eq.s32.totalorder %s19, 0
    %p198 = por %p196, %p197
    %p199 = scmp.le.s32.totalorder 1, %s13
    %p200 = scmp.lt.s32.totalorder %s13, 4
    %p201 = pnand %p199, %p200
    %p202 = pneg %p201
    // Predicated region
    $region9: #{ppo_policy_forward.1} parent=5 // pred_check
      _
    $region10: #{ppo_policy_forward.1} parent=5 // pred_check_branch
      %204 = sbr.rel (%p201) target = $region12
    $region11: #{ppo_policy_forward.1} parent=5 // pred_region
      %s205 = ssub.s32 %s13, 1
      // Predicated region
      $region13: #{ppo_policy_forward.1} parent=11 // pred_check
        %p206 = pneg %p60
      $region14: #{ppo_policy_forward.1} parent=11 // pred_check_branch
        %208 = sbr.rel (%p206) target = $region16
      $region15: #{ppo_policy_forward.1} parent=11 // pred_region
        _
      $region16: #{ppo_policy_forward.1} parent=11 // pred_fallthru
        _
      // Predicated region
      $region17: #{ppo_policy_forward.1} parent=11 // pred_check
        %p209 = pneg %p81
      $region18: #{ppo_policy_forward.1} parent=11 // pred_check_branch
        %211 = sbr.rel (%p209) target = $region20
      $region19: #{ppo_policy_forward.1} parent=11 // pred_region
        _
      $region20: #{ppo_policy_forward.1} parent=11 // pred_fallthru
        _
      // Predicated region
      $region21: #{ppo_policy_forward.1} parent=11 // pred_check
        %p212 = pneg %p102
      $region22: #{ppo_policy_forward.1} parent=11 // pred_check_branch
        %214 = sbr.rel (%p212) target = $region24
      $region23: #{ppo_policy_forward.1} parent=11 // pred_region
        _
      $region24: #{ppo_policy_forward.1} parent=11 // pred_fallthru
        _
      // Predicated region
      $region25: #{ppo_policy_forward.1} parent=11 // pred_check
        %p215 = pneg %p123
      $region26: #{ppo_policy_forward.1} parent=11 // pred_check_branch
        %217 = sbr.rel (%p215) target = $region28
      $region27: #{ppo_policy_forward.1} parent=11 // pred_region
        _
      $region28: #{ppo_policy_forward.1} parent=11 // pred_fallthru
        _
      // Predicated region
      $region29: #{ppo_policy_forward.1} parent=11 // pred_check
        %p218 = pneg %p144
      $region30: #{ppo_policy_forward.1} parent=11 // pred_check_branch
        %220 = sbr.rel (%p218) target = $region32
      $region31: #{ppo_policy_forward.1} parent=11 // pred_region
        _
      $region32: #{ppo_policy_forward.1} parent=11 // pred_fallthru
        _
      // Predicated region
      $region33: #{ppo_policy_forward.1} parent=11 // pred_check
        %p221 = pneg %p165
      $region34: #{ppo_policy_forward.1} parent=11 // pred_check_branch
        %223 = sbr.rel (%p221) target = $region36
      $region35: #{ppo_policy_forward.1} parent=11 // pred_region
        _
      $region36: #{ppo_policy_forward.1} parent=11 // pred_fallthru
        _
    $region12: #{ppo_policy_forward.1} parent=5 // pred_fallthru
      _
    %p224 = scmp.lt.s32.totalorder %s13, 3
    // Predicated region
    $region37: #{ppo_policy_forward.1} parent=5 // pred_check
      %p225 = pneg %p224
    $region38: #{ppo_policy_forward.1} parent=5 // pred_check_branch
      %227 = sbr.rel (%p225) target = $region40
    $region39: #{ppo_policy_forward.1} parent=5 // pred_region
      // Predicated region
      $region41: #{ppo_policy_forward.1} parent=39 // pred_check
        %p228 = pneg %p33
      $region42: #{ppo_policy_forward.1} parent=39 // pred_check_branch
        %230 = sbr.rel (%p228) target = $region44
      $region43: #{ppo_policy_forward.1} parent=39 // pred_region
        %s231 = smul.u32 2, %s13
        %p232 = scmp.lt.s32.totalorder %s231, 5
        %s233 = scalar_select %p232, %s231, 5
        %s234 = smul.addr %s233, 8
        %s235 = scalar_lea.vmem %s0, %s234
        %s236 = smul.u32 2, %s13
      $region44: #{ppo_policy_forward.1} parent=39 // pred_fallthru
        _
    $region40: #{ppo_policy_forward.1} parent=5 // pred_fallthru
      _
    %p237 = scmp.le.s32.totalorder 1, %s13
    %p238 = scmp.lt.s32.totalorder %s13, 4
    %p239 = pnand %p237, %p238
    %p240 = pneg %p239
    // Predicated region
    $region45: #{ppo_policy_forward.1} parent=5 // pred_check
      _
    $region46: #{ppo_policy_forward.1} parent=5 // pred_check_branch
      %242 = sbr.rel (%p239) target = $region48
    $region47: #{ppo_policy_forward.1} parent=5 // pred_region
      %s243 = ssub.s32 %s13, 1
      %s244 = smul.u32 2, %s18
      %p245 = scmp.lt.s32.totalorder %s244, 5
      %s246 = scalar_select %p245, %s244, 5
      %s247 = smul.addr %s246, 8
      %s248 = scalar_lea.vmem %s0, %s247
      %p249 = pneg %p39
      %p250 = pneg %p36
      %p251 = pneg %p60
      %p252 = pneg %p57
      %p253 = pneg %p81
      %p254 = pneg %p78
      %p255 = pneg %p102
      %p256 = pneg %p99
      %p257 = pneg %p123
      %p258 = pneg %p120
      %p259 = pneg %p144
      %p260 = pneg %p141
      %p261 = pneg %p165
      %p262 = pneg %p162
      %p263 = pneg %p191
      %p264 = pneg %p188
      %s265 = smul.u32 2, %s18
      %p266 = scmp.lt.s32.totalorder %s265, 5
      %s267 = scalar_select %p266, %s265, 5
      %s268 = smul.addr %s267, 8
      %s269 = scalar_lea.vmem %s7, %s268
      %s270 = smul.u32 2, %s18
      %p271 = scmp.lt.s32.totalorder %s270, 5
      %s272 = scalar_select %p271, %s270, 5
      %s273 = smul.addr %s272, 8
      %s274 = scalar_lea.vmem %s0, %s273
      %s275 = smul.u32 2, %s18
      %s276 = smul.u32 2, %s18
      %p277 = scmp.lt.s32.totalorder %s276, 5
      %s278 = scalar_select %p277, %s276, 5
      %s279 = smul.addr %s278, 8
      %s280 = scalar_lea.vmem %s7, %s279
      %s281 = smul.u32 2, %s18
      %v283 = vld [vmem:[%s274] sm:$0xff]
      %v284 = vld [vmem:[%s274 + $0x8] sm:$0xff]
      %v285 = vpack.c.bf16 %v284, %v283
      %v286 = vld [vmem:[%s1] sm:$0xff]
      %v287 = vld [vmem:[%s1 + $0x8] sm:$0xff]
      %v288 = vpack.c.bf16 %v287, %v286
      %v289 = vld [vmem:[%s2] sm:$0x1]
      %v291 = vperm.slane %v289, 0
      %vm293 = vcmask 130048
      %v295 = vsel %vm293, %v285, 0
      %297 = vmatpush.bf16.msra.mxu0 0
      %298 = vmatpush.bf16.msra.mxu0 0
      %299 = vmatpush.bf16.msra.mxu0 0
      %300 = vmatpush.bf16.msra.mxu0 0
      %301 = vmatpush.bf16.msra.mxu0 0
      %302 = vmatpush.bf16.msra.mxu0 0
      %303 = vmatpush.bf16.msra.mxu0 0
      %304 = vmatpush.bf16.msra.mxu0 %v288
      %305 = vmatmul.bf16.gmra.mxu0 %v295
      %v306 = vpop.f32.mrf.mxu0
      %v307 = vadd.f32 %v291, %v306
      %v308 = vpop.f32.mrf.mxu0
      %v309 = vadd.f32 %v291, %v308
      %310 = vdwg.mxu0
      %vm311 = vcmp.gt.f32.partialorder %v307, 0.0
      %vm312 = vcmp.gt.f32.partialorder %v309, 0.0
      %v313 = vmul.f32 %v307, 0.01
      %v314 = vmul.f32 %v309, 0.01
      %v315 = vsel %vm311, %v307, %v313
      %v316 = vsel %vm312, %v309, %v314
      %v317 = vpack.c.bf16 %v316, %v315
      %v318 = vld [vmem:[%s3] sm:$0xff]
      %v319 = vld [vmem:[%s3 + $0x8] sm:$0xff]
      %v320 = vld [vmem:[%s3 + $0x10] sm:$0xff]
      %v321 = vld [vmem:[%s3 + $0x18] sm:$0xff]
      %v322 = vld [vmem:[%s3 + $0x20] sm:$0xff]
      %v323 = vld [vmem:[%s3 + $0x28] sm:$0xff]
      %v324 = vld [vmem:[%s3 + $0x30] sm:$0xff]
      %v325 = vld [vmem:[%s3 + $0x38] sm:$0xff]
      %v326 = vld [vmem:[%s3 + $0x40] sm:$0xff]
      %v327 = vld [vmem:[%s3 + $0x48] sm:$0xff]
      %v328 = vld [vmem:[%s3 + $0x50] sm:$0xff]
      %v329 = vld [vmem:[%s3 + $0x58] sm:$0xff]
      %v330 = vld [vmem:[%s3 + $0x60] sm:$0xff]
      %v331 = vld [vmem:[%s3 + $0x68] sm:$0xff]
      %v332 = vld [vmem:[%s3 + $0x70] sm:$0xff]
      %v333 = vld [vmem:[%s3 + $0x78] sm:$0xff]
      %v334 = vpack.c.bf16 %v319, %v318
      %v335 = vpack.c.bf16 %v321, %v320
      %v336 = vpack.c.bf16 %v323, %v322
      %v337 = vpack.c.bf16 %v325, %v324
      %v338 = vpack.c.bf16 %v327, %v326
      %v339 = vpack.c.bf16 %v329, %v328
      %v340 = vpack.c.bf16 %v331, %v330
      %v341 = vpack.c.bf16 %v333, %v332
      %v342 = vld [vmem:[%s4] sm:$0x1]
      %v344 = vperm.slane %v342, 0
      %346 = vmatpush.bf16.msra.mxu0 %v341
      %347 = vmatpush.bf16.msra.mxu0 %v340
      %348 = vmatpush.bf16.msra.mxu0 %v339
      %349 = vmatpush.bf16.msra.mxu0 %v338
      %350 = vmatpush.bf16.msra.mxu0 %v337
      %351 = vmatpush.bf16.msra.mxu0 %v336
      %352 = vmatpush.bf16.msra.mxu0 %v335
      %353 = vmatpush.bf16.msra.mxu0 %v334
      %354 = vmatmul.bf16.gmra.mxu0 %v317
      %v355 = vpop.f32.mrf.mxu0
      %v356 = vadd.f32 %v344, %v355
      %v357 = vpop.f32.mrf.mxu0
      %v358 = vadd.f32 %v344, %v357
      %359 = vdwg.mxu0
      %vm360 = vcmp.gt.f32.partialorder %v356, 0.0
      %vm361 = vcmp.gt.f32.partialorder %v358, 0.0
      %v362 = vmul.f32 %v356, 0.01
      %v363 = vmul.f32 %v358, 0.01
      %v364 = vsel %vm360, %v356, %v362
      %v365 = vsel %vm361, %v358, %v363
      %v366 = vpack.c.bf16 %v365, %v364
      %v367 = vld [vmem:[%s5] sm:$0xff]
      %v368 = vld [vmem:[%s5 + $0x8] sm:$0xff]
      %v369 = vld [vmem:[%s5 + $0x10] sm:$0xff]
      %v370 = vld [vmem:[%s5 + $0x18] sm:$0xff]
      %v371 = vld [vmem:[%s5 + $0x20] sm:$0xff]
      %v372 = vld [vmem:[%s5 + $0x28] sm:$0xff]
      %v373 = vld [vmem:[%s5 + $0x30] sm:$0xff]
      %v374 = vld [vmem:[%s5 + $0x38] sm:$0xff]
      %v375 = vld [vmem:[%s5 + $0x40] sm:$0xff]
      %v376 = vld [vmem:[%s5 + $0x48] sm:$0xff]
      %v377 = vld [vmem:[%s5 + $0x50] sm:$0xff]
      %v378 = vld [vmem:[%s5 + $0x58] sm:$0xff]
      %v379 = vld [vmem:[%s5 + $0x60] sm:$0xff]
      %v380 = vld [vmem:[%s5 + $0x68] sm:$0xff]
      %v381 = vld [vmem:[%s5 + $0x70] sm:$0xff]
      %v382 = vld [vmem:[%s5 + $0x78] sm:$0xff]
      %v383 = vpack.c.bf16 %v368, %v367
      %v384 = vpack.c.bf16 %v370, %v369
      %v385 = vpack.c.bf16 %v372, %v371
      %v386 = vpack.c.bf16 %v374, %v373
      %v387 = vpack.c.bf16 %v376, %v375
      %v388 = vpack.c.bf16 %v378, %v377
      %v389 = vpack.c.bf16 %v380, %v379
      %v390 = vpack.c.bf16 %v382, %v381
      %v391 = vld [vmem:[%s6] sm:$0x1]
      %v393 = vperm.slane %v391, 0
      %395 = vmatpush.bf16.msra.mxu0 %v390
      %396 = vmatpush.bf16.msra.mxu0 %v389
      %397 = vmatpush.bf16.msra.mxu0 %v388
      %398 = vmatpush.bf16.msra.mxu0 %v387
      %399 = vmatpush.bf16.msra.mxu0 %v386
      %400 = vmatpush.bf16.msra.mxu0 %v385
      %401 = vmatpush.bf16.msra.mxu0 %v384
      %402 = vmatpush.bf16.msra.mxu0 %v383
      %403 = vmatmul.bf16.gmra.mxu0 %v366
      %v404 = vpop.f32.mrf.mxu0
      %v405 = vadd.f32 %v393, %v404
      %v406 = vpop.f32.mrf.mxu0
      %v407 = vadd.f32 %v393, %v406
      %408 = vdwg.mxu0
      %vm409 = vcmask 64512
      %410 = vst.msk [vmem:[%s280] sm:$0xff] %vm409, %v405
      %411 = vst.msk [vmem:[%s280 + $0x8] sm:$0xff] %vm409, %v407
      %s412 = smul.u32 2, %s18
      %p413 = scmp.lt.s32.totalorder %s412, 5
      %s414 = scalar_select %p413, %s412, 5
      %s415 = smul.addr %s414, 8
      %s416 = scalar_lea.vmem %s7, %s415
      // Predicated region
      $region49: #{ppo_policy_forward.1} parent=47 // pred_check
        %p417 = pneg %p188
      $region50: #{ppo_policy_forward.1} parent=47 // pred_check_branch
        %419 = sbr.rel (%p417) target = $region52
      $region51: #{ppo_policy_forward.1} parent=47 // pred_region
        %s420 = smul.u32 2, %s18
      $region52: #{ppo_policy_forward.1} parent=47 // pred_fallthru
        _
    $region48: #{ppo_policy_forward.1} parent=5 // pred_fallthru
      _
    %p421 = scmp.le.s32.totalorder 2, %s13
    // Predicated region
    $region53: #{ppo_policy_forward.1} parent=5 // pred_check
      %p422 = pneg %p421
    $region54: #{ppo_policy_forward.1} parent=5 // pred_check_branch
      %424 = sbr.rel (%p422) target = $region56
    $region55: #{ppo_policy_forward.1} parent=5 // pred_region
      %s425 = ssub.s32 %s13, 2
      // Predicated region
      $region57: #{ppo_policy_forward.1} parent=55 // pred_check
        %p426 = pneg %p194
      $region58: #{ppo_policy_forward.1} parent=55 // pred_check_branch
        %428 = sbr.rel (%p426) target = $region60
      $region59: #{ppo_policy_forward.1} parent=55 // pred_region
        %s429 = smul.u32 2, %s19
        %p430 = scmp.lt.s32.totalorder %s429, 5
        %s431 = scalar_select %p430, %s429, 5
        %s432 = smul.addr %s431, 8
        %s433 = scalar_lea.vmem %s7, %s432
      $region60: #{ppo_policy_forward.1} parent=55 // pred_fallthru
        _
    $region56: #{ppo_policy_forward.1} parent=5 // pred_fallthru
      _
  $region6: #{ppo_policy_forward.1} parent=0 // loop_footer
    %s17 = sadd.s32 1, %s13
  $region7: #{ppo_policy_forward.1} parent=0 // loop_footer_branch
    %12 = sbr.rel target = $region3
  $region8: #{ppo_policy_forward.1} parent=0 // loop_exit
    _

</llo_original>
